<compile_context>
chip_gen: v7x
topology: tpu7x:2x2x1
jax: 0.10.0
libtpu: 0.0.40
codegen_flags: <defaults>
</compile_context>

<pallas_src>
import jax
import jax.numpy as jnp
from jax.experimental import pallas as pl
from jax.experimental.pallas import tpu as pltpu


def _input_norm_kernel(x_ref, scale_ref, bias_ref, o_ref):
    # Single fused multiply-add over a (TB, N) tile; scale/bias are (1, N)
    # rows broadcast across the batch-tile sublanes. Pure VPU work, no
    # MXU/EUP/XLU -> HBM-bandwidth bound on every generation.
    o_ref[...] = x_ref[...] * scale_ref[...] + bias_ref[...]


def _sublane_multiple(dtype):
    # f32 -> 8, bf16 -> 16, int8/fp8 -> 32 (sub-32-bit dtypes pack rows into
    # sublanes; misaligned batch tiles force masked partial stores).
    return max(8, 32 // jnp.dtype(dtype).itemsize)


# ~3 MiB x-tile: input + output double buffers (4 tiles = 12 MiB) fit v5e's
# 16 MiB default scoped-VMEM limit and are comfortably under the v6e/v7x
# defaults (32 MiB) and v7x's 64 MiB physical VMEM.
_TILE_BYTES_BUDGET = 3 * 1024 * 1024
# Ensure the "parallel" batch axis has at least 2 grid steps whenever B
# allows it, so v7x's two TensorCores both get work.
_MIN_GRID_STEPS = 2


def _pick_batch_tile(batch, row_bytes, sublane):
    if batch <= sublane:
        return batch  # full extent (legal: equals the array dim)
    budget_rows = max(sublane, _TILE_BYTES_BUDGET // max(1, row_bytes))
    # Cap tb so the batch grid has >= _MIN_GRID_STEPS steps.
    cap = -(-batch // _MIN_GRID_STEPS)            # ceil(B / 2)
    cap = -(-cap // sublane) * sublane            # round up to sublane
    tb = min(budget_rows, cap)
    return max(sublane, (tb // sublane) * sublane)


def input_norm_forward(x, gamma, beta, *, use_pallas=None):
    """Forward of InputNorm: gamma[c] * x[..., c, h, w] + beta[c, h, w].

    x:     (B, C, H, W) or (C, H, W)
    gamma: (C,)       per-channel scale
    beta:  (C, H, W)  per-(channel, h, w) shift
    use_pallas: None = auto (tiny inputs take the fused-XLA bypass),
                True/False to force.
    """
    squeeze_batch = x.ndim == 3
    if squeeze_batch:
        x = x[None]
    B, C, H, W = x.shape
    assert gamma.shape == (C,) and beta.shape == (C, H, W)

    dtype = x.dtype
    N = C * H * W
    itemsize = jnp.dtype(dtype).itemsize

    # Tiny-input bypass: kernel launch overhead would dominate; XLA fuses
    # the FMA into a single pass with no launch cost.
    if use_pallas is None:
        use_pallas = B * N * itemsize >= (1 << 20)
    if not use_pallas:
        out = x * gamma.astype(dtype)[:, None, None] + beta.astype(dtype)
        return out[0] if squeeze_batch else out

    # Fold channel scale + shift into flat per-lane vectors once in the
    # wrapper; the kernel never re-derives them.
    scale = jnp.repeat(gamma.astype(dtype), H * W).reshape(1, N)
    bias = beta.astype(dtype).reshape(1, N)
    x2 = x.reshape(B, N)

    sublane = _sublane_multiple(dtype)
    tb = _pick_batch_tile(B, N * itemsize, sublane)

    # Ragged grid: no jnp.pad and no out[:B] slice -> no extra HBM passes.
    # Pallas masks the last partial block (OOB reads are harmless for this
    # elementwise FMA, OOB writes are discarded).
    grid = (pl.cdiv(B, tb),)

    out = pl.pallas_call(
        _input_norm_kernel,
        out_shape=jax.ShapeDtypeStruct((B, N), dtype),
        grid=grid,
        in_specs=[
            pl.BlockSpec((tb, N), lambda i: (i, 0)),   # x tile, streamed
            pl.BlockSpec((1, N), lambda i: (0, 0)),    # scale, VMEM-resident
            pl.BlockSpec((1, N), lambda i: (0, 0)),    # bias,  VMEM-resident
        ],
        out_specs=pl.BlockSpec((tb, N), lambda i: (i, 0)),
        compiler_params=pltpu.CompilerParams(
            dimension_semantics=("parallel",)),
    )(x2, scale, bias)

    out = out.reshape(B, C, H, W)
    if squeeze_batch:
        out = out[0]
    return out


if __name__ == "__main__":
    key = jax.random.PRNGKey(0)
    k1, k2, k3, k4, k5 = jax.random.split(key, 5)

    # --- num_channel == 3 branch (einsum path), module-natural small shape.
    B, C, H, W = 2, 3, 16, 16
    x = jax.random.normal(k1, (B, C, H, W), dtype=jnp.float32)
    gamma = jax.random.normal(k2, (C,), dtype=jnp.float32)
    beta = jax.random.normal(k3, (C, H, W), dtype=jnp.float32)
    y_ref = jnp.einsum('bijk,i->bijk', x, gamma) + beta[None]

    # Pallas kernel path (forced: this tiny shape would otherwise take the
    # fused-XLA bypass).
    y = input_norm_forward(x, gamma, beta, use_pallas=True)
    jax.block_until_ready(y)
    assert y.shape == x.shape
    assert jnp.allclose(y, y_ref, atol=1e-5, rtol=1e-5)

    # Default (auto) path: tiny input -> XLA bypass, same numerics.
    y_auto = input_norm_forward(x, gamma, beta)
    jax.block_until_ready(y_auto)
    assert jnp.allclose(y_auto, y_ref, atol=1e-5, rtol=1e-5)

    # --- Multi-step ragged grid (exercises the no-pad masked last block and
    #     the >=2-step batch split).
    B2 = 20
    x_big = jax.random.normal(k4, (B2, C, H, W), dtype=jnp.float32)
    y_big = input_norm_forward(x_big, gamma, beta, use_pallas=True)
    jax.block_until_ready(y_big)
    y_big_ref = jnp.einsum('bijk,i->bijk', x_big, gamma) + beta[None]
    assert jnp.allclose(y_big, y_big_ref, atol=1e-5, rtol=1e-5)

    # --- num_channel == 1 branch (gamma * x + beta path).
    C1 = 1
    x1 = jax.random.normal(k5, (B, C1, H, W), dtype=jnp.float32)
    gamma1 = jnp.full((C1,), 1.5, dtype=jnp.float32)
    beta1 = jnp.full((C1, H, W), 0.25, dtype=jnp.float32)
    y1 = input_norm_forward(x1, gamma1, beta1, use_pallas=True)
    jax.block_until_ready(y1)
    y1_ref = gamma1 * x1 + beta1
    assert jnp.allclose(y1, y1_ref, atol=1e-5, rtol=1e-5)

    print("KERNEL_OK")
</pallas_src>

<mosaic_0001>
module attributes {stable_mosaic.version = 11 : i64} {
  func.func @_input_norm_kernel(%arg0: i32, %arg1: memref<2x768xf32, #tpu.memory_space<vmem>>, %arg2: memref<1x768xf32, #tpu.memory_space<vmem>>, %arg3: memref<1x768xf32, #tpu.memory_space<vmem>>, %arg4: memref<2x768xf32, #tpu.memory_space<vmem>>) attributes {dimension_semantics = [#tpu.dimension_semantics<parallel>], iteration_bounds = array<i64: 1>, scalar_prefetch = 0 : i64, scratch_operands = 0 : i64, tpu.core_type = #tpu.core_type<tc>, window_params = [{transform_indices = @transform_0, window_bounds = array<i64: 2, 768>}, {pipeline_mode = #tpu.pipeline_mode<synchronous>, transform_indices = @transform_1, window_bounds = array<i64: 1, 768>}, {pipeline_mode = #tpu.pipeline_mode<synchronous>, transform_indices = @transform_2, window_bounds = array<i64: 1, 768>}, {transform_indices = @transform_3, window_bounds = array<i64: 2, 768>}]} {
    %c0 = arith.constant 0 : index
    %c0_0 = arith.constant 0 : index
    %0 = vector.load %arg1[%c0, %c0_0] : memref<2x768xf32, #tpu.memory_space<vmem>>, vector<2x768xf32>
    %c0_1 = arith.constant 0 : index
    %c0_2 = arith.constant 0 : index
    %1 = vector.load %arg2[%c0_1, %c0_2] : memref<1x768xf32, #tpu.memory_space<vmem>>, vector<1x768xf32>
    %2 = vector.broadcast %1 : vector<1x768xf32> to vector<2x768xf32>
    %3 = arith.mulf %0, %2 : vector<2x768xf32>
    %c0_3 = arith.constant 0 : index
    %c0_4 = arith.constant 0 : index
    %4 = vector.load %arg3[%c0_3, %c0_4] : memref<1x768xf32, #tpu.memory_space<vmem>>, vector<1x768xf32>
    %5 = vector.broadcast %4 : vector<1x768xf32> to vector<2x768xf32>
    %6 = arith.addf %3, %5 : vector<2x768xf32>
    %c0_5 = arith.constant 0 : index
    %c0_6 = arith.constant 0 : index
    %7 = vector.load %arg4[%c0_5, %c0_6] : memref<2x768xf32, #tpu.memory_space<vmem>>, vector<2x768xf32>
    tpu.vector_store %arg4[%c0_5, %c0_6], %6 {strides = array<i32>} : memref<2x768xf32, #tpu.memory_space<vmem>>, vector<2x768xf32>,
    return
  }
  func.func @transform_0(%arg0: i32) -> (i32, i32) {
    %c0_i32 = arith.constant 0 : i32
    %c0_i32_0 = arith.constant 0 : i32
    return %arg0, %c0_i32 : i32, i32
  }
  func.func @transform_1(%arg0: i32) -> (i32, i32) {
    %c0_i32 = arith.constant 0 : i32
    %c0_i32_0 = arith.constant 0 : i32
    %c0_i32_1 = arith.constant 0 : i32
    return %c0_i32, %c0_i32_0 : i32, i32
  }
  func.func @transform_2(%arg0: i32) -> (i32, i32) {
    %c0_i32 = arith.constant 0 : i32
    %c0_i32_0 = arith.constant 0 : i32
    %c0_i32_1 = arith.constant 0 : i32
    return %c0_i32, %c0_i32_0 : i32, i32
  }
  func.func @transform_3(%arg0: i32) -> (i32, i32) {
    %c0_i32 = arith.constant 0 : i32
    %c0_i32_0 = arith.constant 0 : i32
    return %arg0, %c0_i32 : i32, i32
  }
}

</mosaic_0001>

<llo_original>
// kernel: tpu_custom_call.1
$region0: #{tpu_custom_call.1}
  #allocation0 [shape = 'u32[]', space=smem, size = 0x4, offset = 0x4, fixed_abs, tag = 'smem constant byte address 0x4 - core index']
  #allocation1 [shape = 'u32[144,128]{1,0:T(1,128)}', space=vmem, size = 0x12000, scoped, tag = 'internal scratch']
  %s0 = inlined_call_operand.hbm [shape: f32[2,768], index: 0, kind: input, shape index: {}]
  %s1 = inlined_call_operand.hbm [shape: f32[1,768], index: 1, kind: input, shape index: {}]
  %s2 = inlined_call_operand.vmem [shape: f32[1,768], index: 2, kind: input, shape index: {}]
  %s3 = inlined_call_operand.hbm [shape: f32[2,768], index: 3, kind: output, shape index: {}]
  %s4 = sld [smem:[#allocation0]]
  $region30: #{tpu_custom_call.1} parent=0
    _
  %s6 = ssub.s32 1, %s4
  %s7 = scalar_select 0, %s6, %s4
  $region1: #{tpu_custom_call.1} parent=0
    #allocation2 [shape = 'u8[6144]{0}', space=vmem, size = 0x1800, scoped, tag = 'input window, operand 0, single buffered']
    #allocation3 [shape = 's32[1]{0}', space=sflag, size = 0x4, scoped, tag = 'scoped memory for tpu_custom_call.1']
    #allocation4 [shape = 's32[1]{0}', space=sflag, size = 0x4, scoped, tag = 'scoped memory for tpu_custom_call.1']
    #allocation5 [shape = 'u8[3072]{0}', space=vmem, size = 0xc00, scoped, tag = 'input window, operand 1, single buffered']
    #allocation6 [shape = 's32[1]{0}', space=sflag, size = 0x4, scoped, tag = 'scoped memory for tpu_custom_call.1']
    #allocation7 [shape = 'u8[6144]{0}', space=vmem, size = 0x1800, scoped, tag = 'output window, operand 0, single buffered']
    %8 = vsyncpa [#allocation3], 0
    %9 = vsyncpa [#allocation6], 0
    %10 = vsyncpa [#allocation4], 0
    // Predicated region
    $region2: #{tpu_custom_call.1} parent=1 // pred_check
      _
    $region3: #{tpu_custom_call.1} parent=1 // pred_check_branch
      %12 = sbr.rel (0) target = $region5
    $region4: #{tpu_custom_call.1} parent=1 // pred_region
      %s14 = ssub.s32 192, 192
      %15 = vsyncadd [#allocation3], %s14
      %s17 = sshll.u32 [#allocation2], 4
      %s18 = int_to_ptr.vmem [resolvable:$true] %s17
      %20 = dma.hbm_to_vmem [thread:$0]  %s0, 192, %s18, [#allocation3]
    $region5: #{tpu_custom_call.1} parent=1 // pred_fallthru
      _
    // Predicated region
    $region6: #{tpu_custom_call.1} parent=1 // pred_check
      _
    $region7: #{tpu_custom_call.1} parent=1 // pred_check_branch
      %22 = sbr.rel (0) target = $region9
    $region8: #{tpu_custom_call.1} parent=1 // pred_region
      %s24 = ssub.s32 96, 96
      %25 = vsyncadd [#allocation6], %s24
      %s27 = sshll.u32 [#allocation5], 4
      %s28 = int_to_ptr.vmem [resolvable:$true] %s27
      %30 = dma.hbm_to_vmem [thread:$0]  %s1, 96, %s28, [#allocation6]
    $region9: #{tpu_custom_call.1} parent=1 // pred_fallthru
      _
    // Predicated region
    $region10: #{tpu_custom_call.1} parent=1 // pred_check
      _
    $region11: #{tpu_custom_call.1} parent=1 // pred_check_branch
      %32 = sbr.rel (0) target = $region13
    $region12: #{tpu_custom_call.1} parent=1 // pred_region
      _
    $region13: #{tpu_custom_call.1} parent=1 // pred_fallthru
      _
    // Predicated region
    $region14: #{tpu_custom_call.1} parent=1 // pred_check
      _
    $region15: #{tpu_custom_call.1} parent=1 // pred_check_branch
      %34 = sbr.rel (0) target = $region17
    $region16: #{tpu_custom_call.1} parent=1 // pred_region
      %35 = dma.done [#allocation3], 192
    $region17: #{tpu_custom_call.1} parent=1 // pred_fallthru
      _
    // Predicated region
    $region18: #{tpu_custom_call.1} parent=1 // pred_check
      _
    $region19: #{tpu_custom_call.1} parent=1 // pred_check_branch
      %37 = sbr.rel (0) target = $region21
    $region20: #{tpu_custom_call.1} parent=1 // pred_region
      %38 = dma.done [#allocation6], 96
    $region21: #{tpu_custom_call.1} parent=1 // pred_fallthru
      _
    %v39 = vld [vmem:[#allocation2] sm:$0xff]
    %v40 = vld [vmem:[#allocation2 + $0x8] sm:$0xf]
    %v41 = vld [vmem:[#allocation5] sm:$0x3f]
    %v43 = vlaneseq
    %v44 = vshrl.u32 %v43, 7
    %v45 = vsub.s32 0, %v44
    %v46 = vrot.slane %v41, %v45
    %v47 = vlaneseq
    %v48 = vshrl.u32 %v47, 7
    %v49 = vsub.s32 1, %v48
    %v50 = vrot.slane %v41, %v49
    %v51 = vlaneseq
    %v52 = vshrl.u32 %v51, 7
    %v53 = vsub.s32 2, %v52
    %v54 = vrot.slane %v41, %v53
    %v55 = vlaneseq
    %v56 = vshrl.u32 %v55, 7
    %v57 = vsub.s32 3, %v56
    %v58 = vrot.slane %v41, %v57
    %v59 = vlaneseq
    %v60 = vshrl.u32 %v59, 7
    %v61 = vsub.s32 4, %v60
    %v62 = vrot.slane %v41, %v61
    %v63 = vlaneseq
    %v64 = vshrl.u32 %v63, 7
    %v65 = vsub.s32 5, %v64
    %v66 = vrot.slane %v41, %v65
    %v67 = vcombine.low %v46, %v50
    %v68 = vcombine.low %v54, %v58
    %v70 = vunpack.c.l.s4 1983009808
    %v71 = vunpack.c.0.s8 %v70
    %v72 = vlaneseq
    %v73 = vshrl.u32 %v72, 7
    %v74 = vsub.s32 %v71, %v73
    %v75 = vrot.slane %v67, %v74
    %v77 = vunpack.c.l.s4 1983009808
    %v78 = vunpack.c.0.s8 %v77
    %v79 = vlaneseq
    %v80 = vshrl.u32 %v79, 7
    %v81 = vsub.s32 %v78, %v80
    %v82 = vrot.slane %v68, %v81
    %v83 = vcombine.low %v75, %v82
    %v84 = vcombine.low %v62, %v66
    %v86 = vunpack.c.l.s4 1983009808
    %v87 = vunpack.c.0.s8 %v86
    %v88 = vlaneseq
    %v89 = vshrl.u32 %v88, 7
    %v90 = vsub.s32 %v87, %v89
    %v91 = vrot.slane %v84, %v90
    %v94 = vmul.f32 %v39, %v83
    %v95 = vmul.f32 %v40, %v91
    %v96 = vld [vmem:[%s2] sm:$0x3f]
    %v98 = vlaneseq
    %v99 = vshrl.u32 %v98, 7
    %v100 = vsub.s32 0, %v99
    %v101 = vrot.slane %v96, %v100
    %v102 = vlaneseq
    %v103 = vshrl.u32 %v102, 7
    %v104 = vsub.s32 1, %v103
    %v105 = vrot.slane %v96, %v104
    %v106 = vlaneseq
    %v107 = vshrl.u32 %v106, 7
    %v108 = vsub.s32 2, %v107
    %v109 = vrot.slane %v96, %v108
    %v110 = vlaneseq
    %v111 = vshrl.u32 %v110, 7
    %v112 = vsub.s32 3, %v111
    %v113 = vrot.slane %v96, %v112
    %v114 = vlaneseq
    %v115 = vshrl.u32 %v114, 7
    %v116 = vsub.s32 4, %v115
    %v117 = vrot.slane %v96, %v116
    %v118 = vlaneseq
    %v119 = vshrl.u32 %v118, 7
    %v120 = vsub.s32 5, %v119
    %v121 = vrot.slane %v96, %v120
    %v122 = vcombine.low %v101, %v105
    %v123 = vcombine.low %v109, %v113
    %v125 = vunpack.c.l.s4 1983009808
    %v126 = vunpack.c.0.s8 %v125
    %v127 = vlaneseq
    %v128 = vshrl.u32 %v127, 7
    %v129 = vsub.s32 %v126, %v128
    %v130 = vrot.slane %v122, %v129
    %v132 = vunpack.c.l.s4 1983009808
    %v133 = vunpack.c.0.s8 %v132
    %v134 = vlaneseq
    %v135 = vshrl.u32 %v134, 7
    %v136 = vsub.s32 %v133, %v135
    %v137 = vrot.slane %v123, %v136
    %v138 = vcombine.low %v130, %v137
    %v139 = vcombine.low %v117, %v121
    %v141 = vunpack.c.l.s4 1983009808
    %v142 = vunpack.c.0.s8 %v141
    %v143 = vlaneseq
    %v144 = vshrl.u32 %v143, 7
    %v145 = vsub.s32 %v142, %v144
    %v146 = vrot.slane %v139, %v145
    %v149 = vadd.f32 %v94, %v138
    %v150 = vadd.f32 %v95, %v146
    %151 = vst [vmem:[#allocation7] sm:$0xff] %v149
    %152 = vst [vmem:[#allocation7 + $0x8] sm:$0xf] %v150
    // Predicated region
    $region22: #{tpu_custom_call.1} parent=1 // pred_check
      _
    $region23: #{tpu_custom_call.1} parent=1 // pred_check_branch
      %154 = sbr.rel (0) target = $region25
    $region24: #{tpu_custom_call.1} parent=1 // pred_region
      %s156 = ssub.s32 192, 192
      %157 = vsyncadd [#allocation4], %s156
      %s159 = sshll.u32 [#allocation7], 4
      %s160 = int_to_ptr.vmem [resolvable:$true] %s159
      %162 = dma.vmem_to_hbm [thread:$0]  %s160, 192, %s3, [#allocation4]
    $region25: #{tpu_custom_call.1} parent=1 // pred_fallthru
      _
    // Predicated region
    $region26: #{tpu_custom_call.1} parent=1 // pred_check
      _
    $region27: #{tpu_custom_call.1} parent=1 // pred_check_branch
      %164 = sbr.rel (0) target = $region29
    $region28: #{tpu_custom_call.1} parent=1 // pred_region
      %165 = dma.done [#allocation4], 192
    $region29: #{tpu_custom_call.1} parent=1 // pred_fallthru
      _
    %166 = vsyncpa [#allocation3], 1
    %167 = vsyncpa [#allocation6], 1
    %168 = vsyncpa [#allocation4], 1

</llo_original>
